<compile_context>
chip_gen: v7x
topology: tpu7x:2x2x1
jax: 0.10.0
libtpu: 0.0.40
codegen_flags: <defaults>
</compile_context>

<pallas_src>
import jax
import jax.numpy as jnp
from jax.experimental import pallas as pl
from jax.experimental.pallas import tpu as pltpu


def _mobius_kernel(p_ref, w_ref, b_ref, o_ref):
    # p_ref : (Bt, MP, KP)  bf16  lane-packed im2col patches, Bt samples/step
    # w_ref : (KP, NP)      bf16  block-diagonal (lane-packed) conv weights
    # b_ref : (Bt, 1, NP)   f32   lane-packed per-sample bias
    # o_ref : (Bt, MP, NP)  f32   lane-dense output slab
    Bt, MP, KP = p_ref.shape
    NP = w_ref.shape[-1]
    # Fold the Bt samples into the MXU M dimension: one (Bt*MP, KP) x (KP, NP)
    # matmul per grid step.  The reshape only merges leading (sublane-major)
    # dims with MP a multiple of the sublane tile, so it is a layout no-op.
    lhs = p_ref[...].reshape(Bt * MP, KP)
    acc = jnp.dot(lhs, w_ref[...], preferred_element_type=jnp.float32)
    o_ref[...] = (acc.reshape(Bt, MP, NP) + b_ref[...]).astype(o_ref.dtype)


def _lane_pad_channels(c):
    """Smallest power of two >= c (divides 128 when c <= 128); for c > 128
    round up to a multiple of 128.  Keeps the output store path lane-dense."""
    if c > 128:
        return ((c + 127) // 128) * 128
    d = 1
    while d < c:
        d *= 2
    return d


def _pick_grid(batch, rows_per_sample):
    """Prefer 2 'parallel' grid steps (v7x megacore: both TensorCores) only
    when each step still has M >= 256 rows for the 256-row MXU; otherwise
    collapse everything into one step so the per-step overhead is paid once
    and M is as large as possible (v5e/v6e are single-TC anyway)."""
    # TODO(synk): make this generation-aware (pltpu.get_tpu_info) and budget
    # the per-step block against v7x's 64 MiB VMEM at production shapes.
    for g in (2, 1):
        if batch % g == 0 and (batch // g) * rows_per_sample >= 256:
            return g
    return 1


@jax.jit
def mobius_forward(inp_nchw, coord_t, conv_w_hwio, conv_b, coord_w, coord_b):
    """Forward of Mobius with a synthetic conv encoder.

    inp_nchw : (B, C_in, H, W)  float32   (PyTorch NCHW convention at the API)
    coord_t  : (B, 1)           float32
    returns  : (B, H*W, C_out)  float32
    """
    B, C_in, H, W = inp_nchw.shape
    KH, KW, _, C_out = conv_w_hwio.shape

    # Pad C_out up to a lane-friendly size so the store is never a masked
    # sub-128-lane vst.msk (the documented ~4.5x store cliff).
    C_pad = _lane_pad_channels(C_out)
    pad_c = C_pad - C_out

    # Lane-packing factor: PACK consecutive spatial positions share the
    # 128-lane axis, so the matmul result is already the lane-dense output.
    PACK = max(1, 128 // C_pad)
    while PACK > 1 and (H * W) % PACK != 0:
        PACK //= 2
    MP = (H * W) // PACK                     # packed rows per sample
    KP = PACK * KH * KW * C_in               # packed contraction depth
    NP = PACK * C_pad                        # packed lane width

    G = _pick_grid(B, MP)                    # grid steps
    Bt = B // G                              # samples folded into M per step

    # ---- wrapper-side glue (cheap XLA ops) ---------------------------------
    # NCHW -> NHWC, pad spatially for 'same' 3x3 conv, im2col.
    x_nhwc = jnp.transpose(inp_nchw, (0, 2, 3, 1))
    x_pad = jnp.pad(x_nhwc, ((0, 0), (1, 1), (1, 1), (0, 0)))
    taps = [x_pad[:, ky:ky + H, kx:kx + W, :]
            for ky in range(KH) for kx in range(KW)]
    patches = jnp.stack(taps, axis=3)                 # (B, H, W, KH*KW, C_in)
    # Row-major reshape groups PACK consecutive spatial positions along K.
    patches = patches.reshape(B, MP, KP).astype(jnp.bfloat16)
    # TODO(synk): at production H*W the wrapper im2col inflates activation HBM
    # traffic ~KH*KW x; move the 9-tap formation into the kernel (shifted
    # slices on a padded NHWC VMEM tile) once the patches DMA dominates.

    # Weights: HWIO -> (KH*KW*C_in, C_pad), then block-diagonal replicate so a
    # single K=KP matmul emits PACK spatial positions side by side on lanes.
    w2 = conv_w_hwio.reshape(KH * KW * C_in, C_out)
    if pad_c:
        w2 = jnp.pad(w2, ((0, 0), (0, pad_c)))
    w_blk = jnp.kron(jnp.eye(PACK, dtype=w2.dtype), w2).astype(jnp.bfloat16)
    # TODO(synk): at MXU-bound production sizes drop the kron packing (it is
    # ~PACK x wasted MACs) in favour of a dense (Bt*H*W, 36) x (36, C) matmul.

    # Per-sample bias (conv bias + coord embedding), lane-packed, kept in f32.
    bias = coord_t @ coord_w + coord_b + conv_b                # (B, C_out)
    if pad_c:
        bias = jnp.pad(bias, ((0, 0), (0, pad_c)))
    bias3 = jnp.tile(bias, (1, PACK)).reshape(B, 1, NP)        # (B, 1, NP)

    out_packed = pl.pallas_call(
        _mobius_kernel,
        out_shape=jax.ShapeDtypeStruct((B, MP, NP), jnp.float32),
        grid_spec=pltpu.PrefetchScalarGridSpec(
            num_scalar_prefetch=0,
            grid=(G,),
            in_specs=[
                pl.BlockSpec((Bt, MP, KP), lambda g: (g, 0, 0)),
                pl.BlockSpec((KP, NP), lambda g: (0, 0)),
                pl.BlockSpec((Bt, 1, NP), lambda g: (g, 0, 0)),
            ],
            out_specs=pl.BlockSpec((Bt, MP, NP), lambda g: (g, 0, 0)),
        ),
        compiler_params=pltpu.CompilerParams(
            dimension_semantics=("parallel",)),
    )(patches, w_blk, bias3)

    # Free reshape: (B, MP, NP) row-major is bit-identical to (B, H*W, C_pad)
    # row-major, which equals torch.flatten(feat, 2, 3).permute(0, 2, 1).
    out = out_packed.reshape(B, H * W, C_pad)
    if pad_c:
        out = out[..., :C_out]
    return out


def _reference(inp_nchw, coord_t, conv_w_hwio, conv_b, coord_w, coord_b):
    x_nhwc = jnp.transpose(inp_nchw, (0, 2, 3, 1))
    feat = jax.lax.conv_general_dilated(
        x_nhwc, conv_w_hwio, window_strides=(1, 1), padding="SAME",
        dimension_numbers=("NHWC", "HWIO", "NHWC"))
    bias = coord_t @ coord_w + coord_b + conv_b          # (B, C_out)
    feat = feat + bias[:, None, None, :]
    B, H, W, C = feat.shape
    return feat.reshape(B, H * W, C)                     # == flatten(2,3).permute(0,2,1)


if __name__ == "__main__":
    B, C_in, H, W = 2, 4, 16, 16
    C_out, KH, KW = 32, 3, 3

    key = jax.random.PRNGKey(0)
    k_inp, k_t, k_w, k_b, k_cw, k_cb = jax.random.split(key, 6)

    inp = jax.random.normal(k_inp, (B, C_in, H, W), jnp.float32)
    coord_t = jax.random.uniform(k_t, (B, 1), jnp.float32)

    # deterministic synthetic parameters
    conv_w = 0.1 * jax.random.normal(k_w, (KH, KW, C_in, C_out), jnp.float32)
    conv_b = 0.1 * jax.random.normal(k_b, (C_out,), jnp.float32)
    coord_w = 0.1 * jax.random.normal(k_cw, (1, C_out), jnp.float32)
    coord_b = 0.1 * jax.random.normal(k_cb, (C_out,), jnp.float32)

    out = mobius_forward(inp, coord_t, conv_w, conv_b, coord_w, coord_b)
    out = jax.block_until_ready(out)

    ref = _reference(inp, coord_t, conv_w, conv_b, coord_w, coord_b)
    assert out.shape == (B, H * W, C_out), out.shape
    # bf16 inputs with f32 accumulation -> looser tolerance than pure f32.
    assert jnp.allclose(out, ref, atol=2e-2, rtol=2e-2), float(
        jnp.max(jnp.abs(out - ref)))

    print("KERNEL_OK")
</pallas_src>

<mosaic_0001>
module attributes {stable_mosaic.version = 11 : i64} {
  func.func @_mobius_kernel(%arg0: i32, %arg1: memref<2x64x144xbf16, #tpu.memory_space<vmem>>, %arg2: memref<144x128xbf16, #tpu.memory_space<vmem>>, %arg3: memref<2x1x128xf32, #tpu.memory_space<vmem>>, %arg4: memref<2x64x128xf32, #tpu.memory_space<vmem>>) attributes {dimension_semantics = [#tpu.dimension_semantics<parallel>], iteration_bounds = array<i64: 1>, scalar_prefetch = 0 : i64, scratch_operands = 0 : i64, tpu.core_type = #tpu.core_type<tc>, window_params = [{transform_indices = @transform_0, window_bounds = array<i64: 2, 64, 144>}, {pipeline_mode = #tpu.pipeline_mode<synchronous>, transform_indices = @transform_1, window_bounds = array<i64: 144, 128>}, {transform_indices = @transform_2, window_bounds = array<i64: 2, 1, 128>}, {transform_indices = @transform_3, window_bounds = array<i64: 2, 64, 128>}]} {
    %c0 = arith.constant 0 : index
    %c0_0 = arith.constant 0 : index
    %c0_1 = arith.constant 0 : index
    %0 = vector.load %arg1[%c0, %c0_0, %c0_1] : memref<2x64x144xbf16, #tpu.memory_space<vmem>>, vector<2x64x144xbf16>
    %1 = vector.shape_cast %0 : vector<2x64x144xbf16> to vector<128x144xbf16>
    %c0_2 = arith.constant 0 : index
    %c0_3 = arith.constant 0 : index
    %2 = vector.load %arg2[%c0_2, %c0_3] : memref<144x128xbf16, #tpu.memory_space<vmem>>, vector<144x128xbf16>
    %cst = arith.constant dense<0.000000e+00> : vector<128x128xf32>
    %3 = tpu.matmul %1, %2, %cst {dimension_numbers = #tpu.dot_dimension_numbers<[1], [0], [0], [1], [0, 0, 1, 1], [], []>} : vector<128x144xbf16>, vector<144x128xbf16>, vector<128x128xf32> -> vector<128x128xf32>
    %4 = vector.shape_cast %3 : vector<128x128xf32> to vector<2x64x128xf32>
    %c0_4 = arith.constant 0 : index
    %c0_5 = arith.constant 0 : index
    %c0_6 = arith.constant 0 : index
    %5 = vector.load %arg3[%c0_4, %c0_5, %c0_6] : memref<2x1x128xf32, #tpu.memory_space<vmem>>, vector<2x1x128xf32>
    %6 = vector.broadcast %5 : vector<2x1x128xf32> to vector<2x64x128xf32>
    %7 = arith.addf %4, %6 : vector<2x64x128xf32>
    %c0_7 = arith.constant 0 : index
    %c0_8 = arith.constant 0 : index
    %c0_9 = arith.constant 0 : index
    %8 = vector.load %arg4[%c0_7, %c0_8, %c0_9] : memref<2x64x128xf32, #tpu.memory_space<vmem>>, vector<2x64x128xf32>
    tpu.vector_store %arg4[%c0_7, %c0_8, %c0_9], %7 {strides = array<i32>} : memref<2x64x128xf32, #tpu.memory_space<vmem>>, vector<2x64x128xf32>,
    return
  }
  func.func @transform_0(%arg0: i32) -> (i32, i32, i32) {
    %c0_i32 = arith.constant 0 : i32
    %c0_i32_0 = arith.constant 0 : i32
    %c0_i32_1 = arith.constant 0 : i32
    return %arg0, %c0_i32, %c0_i32_0 : i32, i32, i32
  }
  func.func @transform_1(%arg0: i32) -> (i32, i32) {
    %c0_i32 = arith.constant 0 : i32
    %c0_i32_0 = arith.constant 0 : i32
    %c0_i32_1 = arith.constant 0 : i32
    return %c0_i32, %c0_i32_0 : i32, i32
  }
  func.func @transform_2(%arg0: i32) -> (i32, i32, i32) {
    %c0_i32 = arith.constant 0 : i32
    %c0_i32_0 = arith.constant 0 : i32
    %c0_i32_1 = arith.constant 0 : i32
    return %arg0, %c0_i32, %c0_i32_0 : i32, i32, i32
  }
  func.func @transform_3(%arg0: i32) -> (i32, i32, i32) {
    %c0_i32 = arith.constant 0 : i32
    %c0_i32_0 = arith.constant 0 : i32
    %c0_i32_1 = arith.constant 0 : i32
    return %arg0, %c0_i32, %c0_i32_0 : i32, i32, i32
  }
}

</mosaic_0001>

<llo_original>
// kernel: mul.4
$region0: #{mul.4}
  %s0 = inlined_call_operand.vmem [shape: f32[3,3,4,32], index: 0, kind: input, shape index: {}]
  %s1 = inlined_call_operand.vmem [shape: f32[36,32], index: 1, kind: output, shape index: {}]
  $region1: #{mul.4} parent=0
    #allocation0 [shape = 'u8[36864]{0}', space=vmem, size = 0x9000, scoped, tag = 'scoped mem for input reshape']
    %s3 = sshllo.u32 0, 4
    %s4 = smul.addr 4, 8
    %s5 = scalar_lea.vmem %s0, %s4
    %v6 = vld [vmem:[%s5] sm:%s3]
    %s7 = scalar_lea.vmem [#allocation0], 64
    %8 = vst [vmem:[%s7] sm:%s3] %v6
    %s9 = smul.addr 4, 7
    %s10 = scalar_lea.vmem %s0, %s9
    %v11 = vld [vmem:[%s10] sm:%s3]
    %s12 = scalar_lea.vmem [#allocation0], 56
    %13 = vst [vmem:[%s12] sm:%s3] %v11
    %s14 = smul.addr 4, 6
    %s15 = scalar_lea.vmem %s0, %s14
    %v16 = vld [vmem:[%s15] sm:%s3]
    %s17 = scalar_lea.vmem [#allocation0], 48
    %18 = vst [vmem:[%s17] sm:%s3] %v16
    %s19 = smul.addr 4, 5
    %s20 = scalar_lea.vmem %s0, %s19
    %v21 = vld [vmem:[%s20] sm:%s3]
    %s22 = scalar_lea.vmem [#allocation0], 40
    %23 = vst [vmem:[%s22] sm:%s3] %v21
    %s24 = smul.addr 4, 4
    %s25 = scalar_lea.vmem %s0, %s24
    %v26 = vld [vmem:[%s25] sm:%s3]
    %s27 = scalar_lea.vmem [#allocation0], 32
    %28 = vst [vmem:[%s27] sm:%s3] %v26
    %s29 = smul.addr 4, 3
    %s30 = scalar_lea.vmem %s0, %s29
    %v31 = vld [vmem:[%s30] sm:%s3]
    %s32 = scalar_lea.vmem [#allocation0], 24
    %33 = vst [vmem:[%s32] sm:%s3] %v31
    %s34 = smul.addr 4, 2
    %s35 = scalar_lea.vmem %s0, %s34
    %v36 = vld [vmem:[%s35] sm:%s3]
    %s37 = scalar_lea.vmem [#allocation0], 16
    %38 = vst [vmem:[%s37] sm:%s3] %v36
    %s39 = scalar_lea.vmem %s0, 4
    %v40 = vld [vmem:[%s39] sm:%s3]
    %s41 = scalar_lea.vmem [#allocation0], 8
    %42 = vst [vmem:[%s41] sm:%s3] %v40
    %v43 = vld [vmem:[%s0] sm:%s3]
    %44 = vst [vmem:[#allocation0] sm:%s3] %v43
    %v45 = vld [vmem:[#allocation0] sm:$0xf]
    %vm46 = vcmask 261120
    %47 = vst.msk [vmem:[%s1] sm:$0xf] %vm46, %v45
    %s48 = scalar_lea.vmem [#allocation0], 8
    %v49 = vld [vmem:[%s48] sm:$0xf]
    %vm50 = vcmask 261120
    %s51 = scalar_lea.vmem %s1, 4
    %52 = vst.msk [vmem:[%s51] sm:$0xf] %vm50, %v49
    %s53 = scalar_lea.vmem [#allocation0], 16
    %v54 = vld [vmem:[%s53] sm:$0xf]
    %vm55 = vcmask 261120
    %s56 = scalar_lea.vmem %s1, 8
    %57 = vst.msk [vmem:[%s56] sm:$0xf] %vm55, %v54
    %s58 = scalar_lea.vmem [#allocation0], 24
    %v59 = vld [vmem:[%s58] sm:$0xf]
    %vm60 = vcmask 261120
    %s61 = scalar_lea.vmem %s1, 12
    %62 = vst.msk [vmem:[%s61] sm:$0xf] %vm60, %v59
    %s63 = scalar_lea.vmem [#allocation0], 32
    %v64 = vld [vmem:[%s63] sm:$0xf]
    %vm65 = vcmask 261120
    %s66 = scalar_lea.vmem %s1, 16
    %67 = vst.msk [vmem:[%s66] sm:$0xf] %vm65, %v64
    %s68 = scalar_lea.vmem [#allocation0], 40
    %v69 = vld [vmem:[%s68] sm:$0xf]
    %vm70 = vcmask 261120
    %s71 = scalar_lea.vmem %s1, 20
    %72 = vst.msk [vmem:[%s71] sm:$0xf] %vm70, %v69
    %s73 = scalar_lea.vmem [#allocation0], 48
    %v74 = vld [vmem:[%s73] sm:$0xf]
    %vm75 = vcmask 261120
    %s76 = scalar_lea.vmem %s1, 24
    %77 = vst.msk [vmem:[%s76] sm:$0xf] %vm75, %v74
    %s78 = scalar_lea.vmem [#allocation0], 56
    %v79 = vld [vmem:[%s78] sm:$0xf]
    %vm80 = vcmask 261120
    %s81 = scalar_lea.vmem %s1, 28
    %82 = vst.msk [vmem:[%s81] sm:$0xf] %vm80, %v79
    %s83 = scalar_lea.vmem [#allocation0], 64
    %v84 = vld [vmem:[%s83] sm:$0xf]
    %vm85 = vcmask 261120
    %s86 = scalar_lea.vmem %s1, 32
    %87 = vst.msk [vmem:[%s86] sm:$0xf] %vm85, %v84

// kernel: mobius_forward.1
$region0: #{mobius_forward.1}
  #allocation0 [shape = 'u32[]', space=smem, size = 0x4, offset = 0x4, fixed_abs, tag = 'smem constant byte address 0x4 - core index']
  #allocation1 [shape = 'u32[144,128]{1,0:T(1,128)}', space=vmem, size = 0x12000, scoped, tag = 'internal scratch']
  %s0 = inlined_call_operand.vmem [shape: bf16[2,64,144], index: 0, kind: input, shape index: {}]
  %s1 = inlined_call_operand.vmem [shape: bf16[144,128], index: 1, kind: input, shape index: {}]
  %s2 = inlined_call_operand.vmem [shape: f32[2,1,128], index: 2, kind: input, shape index: {}]
  %s3 = inlined_call_operand.vmem [shape: f32[2,64,128], index: 3, kind: output, shape index: {}]
  %s4 = sld [smem:[#allocation0]]
  $region22: #{mobius_forward.1} parent=0
    _
  %s6 = ssub.s32 1, %s4
  %s7 = scalar_select 0, %s6, %s4
  // Predicated region
  $region2: #{mobius_forward.1} parent=0 // pred_check
    _
  $region3: #{mobius_forward.1} parent=0 // pred_check_branch
    %9 = sbr.rel (0) target = $region5
  $region4: #{mobius_forward.1} parent=0 // pred_region
    _
  $region5: #{mobius_forward.1} parent=0 // pred_fallthru
    _
  // Predicated region
  $region6: #{mobius_forward.1} parent=0 // pred_check
    _
  $region7: #{mobius_forward.1} parent=0 // pred_check_branch
    %11 = sbr.rel (0) target = $region9
  $region8: #{mobius_forward.1} parent=0 // pred_region
    _
  $region9: #{mobius_forward.1} parent=0 // pred_fallthru
    _
  // Predicated region
  $region10: #{mobius_forward.1} parent=0 // pred_check
    _
  $region11: #{mobius_forward.1} parent=0 // pred_check_branch
    %13 = sbr.rel (0) target = $region13
  $region12: #{mobius_forward.1} parent=0 // pred_region
    _
  $region13: #{mobius_forward.1} parent=0 // pred_fallthru
    _
  %v15 = vld [vmem:[%s0] sm:$0xff]
  %v16 = vld [vmem:[%s0 + $0x8] sm:$0xff]
  %v17 = vld [vmem:[%s0 + $0x10] sm:$0xff]
  %v18 = vld [vmem:[%s0 + $0x18] sm:$0xff]
  %v19 = vld [vmem:[%s0 + $0x20] sm:$0xff]
  %v20 = vld [vmem:[%s0 + $0x28] sm:$0xff]
  %v21 = vld [vmem:[%s0 + $0x30] sm:$0xff]
  %v22 = vld [vmem:[%s0 + $0x38] sm:$0xff]
  %v23 = vld [vmem:[%s0 + $0x40] sm:$0xff]
  %v24 = vld [vmem:[%s0 + $0x48] sm:$0xff]
  %v25 = vld [vmem:[%s0 + $0x50] sm:$0xff]
  %v26 = vld [vmem:[%s0 + $0x58] sm:$0xff]
  %v27 = vld [vmem:[%s0 + $0x60] sm:$0xff]
  %v28 = vld [vmem:[%s0 + $0x68] sm:$0xff]
  %v29 = vld [vmem:[%s0 + $0x70] sm:$0xff]
  %v30 = vld [vmem:[%s0 + $0x78] sm:$0xff]
  %v31 = vld [vmem:[%s1] sm:$0xf]
  %v32 = vld [vmem:[%s1 + $0x4] sm:$0xf]
  %v33 = vld [vmem:[%s1 + $0x8] sm:$0xf]
  %v34 = vld [vmem:[%s1 + $0xc] sm:$0xf]
  %v35 = vld [vmem:[%s1 + $0x10] sm:$0xf]
  %v36 = vld [vmem:[%s1 + $0x14] sm:$0xf]
  %v37 = vld [vmem:[%s1 + $0x18] sm:$0xf]
  %v38 = vld [vmem:[%s1 + $0x1c] sm:$0xf]
  %v39 = vld [vmem:[%s1 + $0x20] sm:$0xf]
  %v40 = vld [vmem:[%s1 + $0x24] sm:$0xf]
  %v41 = vld [vmem:[%s1 + $0x28] sm:$0xf]
  %v42 = vld [vmem:[%s1 + $0x2c] sm:$0xf]
  %v43 = vld [vmem:[%s1 + $0x30] sm:$0xf]
  %v44 = vld [vmem:[%s1 + $0x34] sm:$0xf]
  %v45 = vld [vmem:[%s1 + $0x38] sm:$0xf]
  %v46 = vld [vmem:[%s1 + $0x3c] sm:$0xf]
  %v47 = vld [vmem:[%s1 + $0x40] sm:$0xf]
  %v48 = vld [vmem:[%s1 + $0x44] sm:$0xf]
  %v65 = vunpack.c.l.b16 %v15
  %v66 = vunpack.c.h.b16 %v15
  %v67 = vunpack.c.l.b16 %v16
  %v68 = vunpack.c.h.b16 %v16
  %v69 = vunpack.c.l.b16 %v17
  %v70 = vunpack.c.h.b16 %v17
  %v71 = vunpack.c.l.b16 %v18
  %v72 = vunpack.c.h.b16 %v18
  %v73 = vunpack.c.l.b16 %v19
  %v74 = vunpack.c.h.b16 %v19
  %v75 = vunpack.c.l.b16 %v20
  %v76 = vunpack.c.h.b16 %v20
  %v77 = vunpack.c.l.b16 %v21
  %v78 = vunpack.c.h.b16 %v21
  %v79 = vunpack.c.l.b16 %v22
  %v80 = vunpack.c.h.b16 %v22
  %v81 = vunpack.c.l.b16 %v23
  %v82 = vunpack.c.h.b16 %v23
  %v83 = vunpack.c.l.b16 %v24
  %v84 = vunpack.c.h.b16 %v24
  %v85 = vunpack.c.l.b16 %v25
  %v86 = vunpack.c.h.b16 %v25
  %v87 = vunpack.c.l.b16 %v26
  %v88 = vunpack.c.h.b16 %v26
  %v89 = vunpack.c.l.b16 %v27
  %v90 = vunpack.c.h.b16 %v27
  %v91 = vunpack.c.l.b16 %v28
  %v92 = vunpack.c.h.b16 %v28
  %v93 = vunpack.c.l.b16 %v29
  %v94 = vunpack.c.h.b16 %v29
  %v95 = vunpack.c.l.b16 %v30
  %v96 = vunpack.c.h.b16 %v30
  %v97 = vpack.c.b16 %v67, %v65
  %v98 = vpack.c.b16 %v68, %v66
  %v99 = vpack.c.b16 %v71, %v69
  %v100 = vpack.c.b16 %v72, %v70
  %v101 = vpack.c.b16 %v75, %v73
  %v102 = vpack.c.b16 %v76, %v74
  %v103 = vpack.c.b16 %v79, %v77
  %v104 = vpack.c.b16 %v80, %v78
  %v105 = vpack.c.b16 %v83, %v81
  %v106 = vpack.c.b16 %v84, %v82
  %v107 = vpack.c.b16 %v87, %v85
  %v108 = vpack.c.b16 %v88, %v86
  %v109 = vpack.c.b16 %v91, %v89
  %v110 = vpack.c.b16 %v92, %v90
  %v111 = vpack.c.b16 %v95, %v93
  %v112 = vpack.c.b16 %v96, %v94
  %v139 = vunpack.c.l.b16 %v31
  %v140 = vunpack.c.l.b16 %v32
  %v141 = vunpack.c.l.b16 %v33
  %v142 = vunpack.c.l.b16 %v34
  %v143 = vunpack.c.l.b16 %v35
  %v144 = vunpack.c.l.b16 %v36
  %v145 = vunpack.c.l.b16 %v37
  %v146 = vunpack.c.l.b16 %v38
  %v147 = vunpack.c.l.b16 %v39
  %v148 = vunpack.c.l.b16 %v40
  %v149 = vunpack.c.l.b16 %v41
  %v150 = vunpack.c.l.b16 %v42
  %v151 = vunpack.c.l.b16 %v43
  %v152 = vunpack.c.l.b16 %v44
  %v153 = vunpack.c.l.b16 %v45
  %v154 = vunpack.c.l.b16 %v46
  %v155 = vunpack.c.l.b16 %v47
  %v156 = vunpack.c.l.b16 %v48
  %v157 = vpack.c.b16 %v140, %v139
  %v158 = vpack.c.b16 %v142, %v141
  %v159 = vpack.c.b16 %v144, %v143
  %v160 = vpack.c.b16 %v146, %v145
  %v161 = vpack.c.b16 %v148, %v147
  %v162 = vpack.c.b16 %v150, %v149
  %v163 = vpack.c.b16 %v152, %v151
  %v164 = vpack.c.b16 %v154, %v153
  %v165 = vpack.c.b16 %v156, %v155
  %vm175 = vcmask 130048
  %v177 = vsel %vm175, %v98, 0
  %v180 = vsel %vm175, %v100, 0
  %v183 = vsel %vm175, %v102, 0
  %v186 = vsel %vm175, %v104, 0
  %v189 = vsel %vm175, %v106, 0
  %v192 = vsel %vm175, %v108, 0
  %v195 = vsel %vm175, %v110, 0
  %v198 = vsel %vm175, %v112, 0
  %200 = vmatprep.subr.bf16.mxu0 0
  %201 = vmatpush1.bf16.msra.mxu0 %v157
  %202 = vmatprep.subr.bf16.mxu0 0
  %203 = vmatpush1.bf16.msra.mxu0 %v158
  %204 = vmatprep.subr.bf16.mxu0 0
  %205 = vmatpush1.bf16.msra.mxu0 %v159
  %206 = vmatprep.subr.bf16.mxu0 0
  %207 = vmatpush1.bf16.msra.mxu0 %v160
  %208 = vmatprep.subr.bf16.mxu0 0
  %209 = vmatpush1.bf16.msra.mxu0 %v161
  %210 = vmatprep.subr.bf16.mxu0 0
  %211 = vmatpush1.bf16.msra.mxu0 %v162
  %212 = vmatprep.subr.bf16.mxu0 0
  %213 = vmatpush1.bf16.msra.mxu0 %v163
  %214 = vmatprep.subr.bf16.mxu0 0
  %215 = vmatpush1.bf16.msra.mxu0 %v164
  %216 = vmatprep.subr.bf16.mxu0 0
  %217 = vmatpush1.bf16.msra.mxu0 %v165
  %218 = vmatprep.subr.bf16.mxu0 0
  %219 = vmatpush1.bf16.msra.mxu0 0
  %220 = vmatprep.subr.bf16.mxu0 0
  %221 = vmatpush1.bf16.msra.mxu0 0
  %222 = vmatprep.subr.bf16.mxu0 0
  %223 = vmatpush1.bf16.msra.mxu0 0
  %224 = vmatprep.subr.bf16.mxu0 0
  %225 = vmatpush1.bf16.msra.mxu0 0
  %226 = vmatprep.subr.bf16.mxu0 0
  %227 = vmatpush1.bf16.msra.mxu0 0
  %228 = vmatprep.subr.bf16.mxu0 0
  %229 = vmatpush1.bf16.msra.mxu0 0
  %230 = vmatprep.subr.bf16.mxu0 0
  %231 = vmatpush1.bf16.msra.mxu0 0
  %232 = vmatprep.mubr.bf16.mxu0 %v177
  %233 = vmatmul.mubr.bf16.gmra.mrb[0].mxu0 %v97
  %v234 = vpop.f32.mrb[0].mxu0
  %v235 = vadd.f32 0.0, %v234
  %v236 = vpop.f32.mrb[0].mxu0
  %v237 = vpop.f32.mrb[0].mxu0
  %v238 = vadd.f32 0.0, %v237
  %v239 = vpop.f32.mrb[0].mxu0
  %240 = vmatprep.mubr.bf16.mxu0 %v180
  %241 = vmatmul.mubr.bf16.gmra.mrb[0].mxu0 %v99
  %v242 = vpop.f32.mrb[0].mxu0
  %v243 = vadd.f32 0.0, %v242
  %v244 = vpop.f32.mrb[0].mxu0
  %v245 = vpop.f32.mrb[0].mxu0
  %v246 = vadd.f32 0.0, %v245
  %v247 = vpop.f32.mrb[0].mxu0
  %248 = vmatprep.mubr.bf16.mxu0 %v183
  %249 = vmatmul.mubr.bf16.gmra.mrb[0].mxu0 %v101
  %v250 = vpop.f32.mrb[0].mxu0
  %v251 = vadd.f32 0.0, %v250
  %v252 = vpop.f32.mrb[0].mxu0
  %v253 = vpop.f32.mrb[0].mxu0
  %v254 = vadd.f32 0.0, %v253
  %v255 = vpop.f32.mrb[0].mxu0
  %256 = vmatprep.mubr.bf16.mxu0 %v186
  %257 = vmatmul.mubr.bf16.gmra.mrb[0].mxu0 %v103
  %v258 = vpop.f32.mrb[0].mxu0
  %v259 = vadd.f32 0.0, %v258
  %v260 = vpop.f32.mrb[0].mxu0
  %v261 = vpop.f32.mrb[0].mxu0
  %v262 = vadd.f32 0.0, %v261
  %v263 = vpop.f32.mrb[0].mxu0
  %264 = vmatprep.mubr.bf16.mxu0 %v189
  %265 = vmatmul.mubr.bf16.gmra.mrb[0].mxu0 %v105
  %v266 = vpop.f32.mrb[0].mxu0
  %v267 = vadd.f32 0.0, %v266
  %v268 = vpop.f32.mrb[0].mxu0
  %v269 = vpop.f32.mrb[0].mxu0
  %v270 = vadd.f32 0.0, %v269
  %v271 = vpop.f32.mrb[0].mxu0
  %272 = vmatprep.mubr.bf16.mxu0 %v192
  %273 = vmatmul.mubr.bf16.gmra.mrb[0].mxu0 %v107
  %v274 = vpop.f32.mrb[0].mxu0
  %v275 = vadd.f32 0.0, %v274
  %v276 = vpop.f32.mrb[0].mxu0
  %v277 = vpop.f32.mrb[0].mxu0
  %v278 = vadd.f32 0.0, %v277
  %v279 = vpop.f32.mrb[0].mxu0
  %280 = vmatprep.mubr.bf16.mxu0 %v195
  %281 = vmatmul.mubr.bf16.gmra.mrb[0].mxu0 %v109
  %v282 = vpop.f32.mrb[0].mxu0
  %v283 = vadd.f32 0.0, %v282
  %v284 = vpop.f32.mrb[0].mxu0
  %v285 = vpop.f32.mrb[0].mxu0
  %v286 = vadd.f32 0.0, %v285
  %v287 = vpop.f32.mrb[0].mxu0
  %288 = vmatprep.mubr.bf16.mxu0 %v198
  %289 = vmatmul.mubr.bf16.gmra.mrb[0].mxu0 %v111
  %v290 = vpop.f32.mrb[0].mxu0
  %v291 = vadd.f32 0.0, %v290
  %v292 = vpop.f32.mrb[0].mxu0
  %v293 = vpop.f32.mrb[0].mxu0
  %v294 = vadd.f32 0.0, %v293
  %v295 = vpop.f32.mrb[0].mxu0
  %296 = vdwg.mxu0
  %v297 = vld [vmem:[%s2] sm:$0x1]
  %v298 = vld [vmem:[%s2 + $0x1] sm:$0x1]
  %v301 = vlaneseq
  %v302 = vshrl.u32 %v301, 7
  %v303 = vsub.s32 0, %v302
  %v304 = vrot.slane %v297, %v303
  %v305 = vlaneseq
  %v306 = vshrl.u32 %v305, 7
  %v307 = vsub.s32 0, %v306
  %v308 = vrot.slane %v298, %v307
  %v311 = vadd.f32 %v235, %v304
  %v312 = vadd.f32 %v238, %v304
  %v313 = vadd.f32 %v243, %v304
  %v314 = vadd.f32 %v246, %v304
  %v315 = vadd.f32 %v251, %v304
  %v316 = vadd.f32 %v254, %v304
  %v317 = vadd.f32 %v259, %v304
  %v318 = vadd.f32 %v262, %v304
  %v319 = vadd.f32 %v267, %v308
  %v320 = vadd.f32 %v270, %v308
  %v321 = vadd.f32 %v275, %v308
  %v322 = vadd.f32 %v278, %v308
  %v323 = vadd.f32 %v283, %v308
  %v324 = vadd.f32 %v286, %v308
  %v325 = vadd.f32 %v291, %v308
  %v326 = vadd.f32 %v294, %v308
  %327 = vst [vmem:[%s3] sm:$0xff] %v311
  %328 = vst [vmem:[%s3 + $0x8] sm:$0xff] %v312
  %329 = vst [vmem:[%s3 + $0x10] sm:$0xff] %v313
  %330 = vst [vmem:[%s3 + $0x18] sm:$0xff] %v314
  %331 = vst [vmem:[%s3 + $0x20] sm:$0xff] %v315
  %332 = vst [vmem:[%s3 + $0x28] sm:$0xff] %v316
  %333 = vst [vmem:[%s3 + $0x30] sm:$0xff] %v317
  %334 = vst [vmem:[%s3 + $0x38] sm:$0xff] %v318
  %335 = vst [vmem:[%s3 + $0x40] sm:$0xff] %v319
  %336 = vst [vmem:[%s3 + $0x48] sm:$0xff] %v320
  %337 = vst [vmem:[%s3 + $0x50] sm:$0xff] %v321
  %338 = vst [vmem:[%s3 + $0x58] sm:$0xff] %v322
  %339 = vst [vmem:[%s3 + $0x60] sm:$0xff] %v323
  %340 = vst [vmem:[%s3 + $0x68] sm:$0xff] %v324
  %341 = vst [vmem:[%s3 + $0x70] sm:$0xff] %v325
  %342 = vst [vmem:[%s3 + $0x78] sm:$0xff] %v326
  // Predicated region
  $region14: #{mobius_forward.1} parent=0 // pred_check
    _
  $region15: #{mobius_forward.1} parent=0 // pred_check_branch
    %344 = sbr.rel (0) target = $region17
  $region16: #{mobius_forward.1} parent=0 // pred_region
    _
  $region17: #{mobius_forward.1} parent=0 // pred_fallthru
    _
  // Predicated region
  $region18: #{mobius_forward.1} parent=0 // pred_check
    _
  $region19: #{mobius_forward.1} parent=0 // pred_check_branch
    %346 = sbr.rel (0) target = $region21
  $region20: #{mobius_forward.1} parent=0 // pred_region
    _
  $region21: #{mobius_forward.1} parent=0 // pred_fallthru
    _

</llo_original>
